<compile_context>
chip_gen: v7x
topology: tpu7x:2x2x1
jax: 0.10.0
libtpu: 0.0.40
codegen_flags: <defaults>
</compile_context>

<pallas_src>
import jax
import jax.numpy as jnp
from jax import lax
from jax.experimental import pallas as pl
from jax.experimental.pallas import tpu as pltpu


# ----------------------------------------------------------------------------
# Pallas kernel: fused pooler + projection head + softmax over the batch axis
# ----------------------------------------------------------------------------
def jump_head_kernel(x_ref, pw_ref, pb_ref, w1_ref, b1_ref, w2_ref, o_ref):
    # x:  [B, D] bf16  masked-mean token representation (pre-pooler)
    # pw: [D, D] bf16  pooler weight        pb: [1, D] f32  pooler bias
    # w1: [D, D] bf16  projection weight    b1: [1, D] f32  projection bias
    # w2: [1, D] bf16  Linear(dim, 1) weight stored as a row
    # o:  [1, B] f32   softmax(logits) over the batch axis (lane-dense row)
    x = x_ref[...]

    # Fused pooler: tanh(x @ pool_w + pool_b)            (MXU, f32 accumulate)
    p = jnp.dot(x, pw_ref[...], preferred_element_type=jnp.float32) + pb_ref[...]
    p = jnp.tanh(p)

    # Linear(dim, dim) + ReLU                            (MXU, f32 accumulate)
    h = jnp.dot(p.astype(jnp.bfloat16), w1_ref[...],
                preferred_element_type=jnp.float32) + b1_ref[...]
    h = jnp.maximum(h, 0.0)

    # Linear(dim, 1): contract hidden dim of the w2 row against hidden dim of
    # h ("q @ k^T" pattern) -> logits land directly as a lane-dense [1, B]
    # row.  b2 is dropped: the batch-axis softmax is shift-invariant.
    logits = lax.dot_general(
        w2_ref[...], h.astype(jnp.bfloat16),
        dimension_numbers=(((1,), (1,)), ((), ())),
        preferred_element_type=jnp.float32)              # [1, B]

    # torch.softmax(logits, 0): batch axis == lane axis of the [1, B] row.
    m = jnp.max(logits, axis=1, keepdims=True)
    e = jnp.exp(logits - m)
    denom = jnp.sum(e, axis=1, keepdims=True)
    # Exact reciprocal keeps the |sum(probs) - 1| < 1e-5 check tight.
    o_ref[...] = (e * pl.reciprocal(denom, approx=False)).astype(o_ref.dtype)


def jump_projection_softmax(pooled_raw, pool_w, pool_b, w1, b1, w2):
    """pooled_raw: [B, D] pre-pooler representation -> probs [B] (softmax over batch)."""
    B, D = pooled_raw.shape
    # bf16 operands for the MXU (halves weight/activation DMA); biases stay f32.
    x_bf = pooled_raw.astype(jnp.bfloat16)
    pw_bf = pool_w.astype(jnp.bfloat16)
    w1_bf = w1.astype(jnp.bfloat16)
    w2_row = w2.reshape(1, D).astype(jnp.bfloat16)
    pb_row = pool_b.reshape(1, D).astype(jnp.float32)
    b1_row = b1.reshape(1, D).astype(jnp.float32)

    full = lambda shape: pl.BlockSpec(shape, lambda i: (0, 0))
    # NOTE: at realistic retriever sizes (D=768/1024, B in the thousands) the
    # batch should become a "parallel" grid axis with a two-pass / online
    # softmax, and tiles sized for v7x's 64 MiB VMEM.  At B=8, D=128 a single
    # grid step with full blocks is optimal (launch overhead dominates).
    out = pl.pallas_call(
        jump_head_kernel,
        out_shape=jax.ShapeDtypeStruct((1, B), jnp.float32),
        grid=(1,),
        in_specs=[
            full((B, D)),        # x (pre-pooler)
            full((D, D)),        # pool_w
            full((1, D)),        # pool_b
            full((D, D)),        # w1
            full((1, D)),        # b1
            full((1, D)),        # w2 as a row
        ],
        out_specs=full((1, B)),  # lane-dense probs row
        compiler_params=pltpu.CompilerParams(
            dimension_semantics=("arbitrary",)),
    )(x_bf, pw_bf, pb_row, w1_bf, b1_row, w2_row)
    return out[0, :]


# ----------------------------------------------------------------------------
# Deterministic stand-in for `self.base` (pretrained transformer encoder).
# TODO(synk): the pretrained BERT encoder has no Pallas equivalent without a
#             checkpoint; this stand-in does embedding lookup + masked mean
#             pooling; the tanh pooler itself is fused into the Pallas kernel.
# ----------------------------------------------------------------------------
def base_stand_in(input_tokens, input_types, input_masks, params):
    tok_emb = params["tok_emb"][input_tokens]            # [B, S, D]
    typ_emb = params["typ_emb"][input_types]             # [B, S, D]
    emb = tok_emb + typ_emb
    mask = input_masks.astype(jnp.float32)[..., None]    # [B, S, 1]
    pooled_raw = (emb * mask).sum(axis=1) / jnp.maximum(mask.sum(axis=1), 1.0)
    return pooled_raw                                     # [B, D] (pre-pooler)


def jump_model_forward(input_tokens, input_types, input_masks, params):
    pooled_raw = base_stand_in(input_tokens, input_types, input_masks, params)
    probs = jump_projection_softmax(
        pooled_raw.astype(jnp.float32),
        params["pool_w"], params["pool_b"],
        params["w1"], params["b1"], params["w2"])
    return probs


# ----------------------------------------------------------------------------
# Parameter init + driver
# ----------------------------------------------------------------------------
def init_params(key, dim=128, vocab=32):
    ks = jax.random.split(key, 6)
    s = 0.02
    return {
        "tok_emb": s * jax.random.normal(ks[0], (vocab, dim), jnp.float32),
        "typ_emb": s * jax.random.normal(ks[1], (2, dim), jnp.float32),
        "pool_w":  s * jax.random.normal(ks[2], (dim, dim), jnp.float32),
        "pool_b":  jnp.zeros((dim,), jnp.float32),
        "w1":      s * jax.random.normal(ks[3], (dim, dim), jnp.float32),
        "b1":      jnp.zeros((1, dim), jnp.float32),
        "w2":      s * jax.random.normal(ks[4], (dim, 1), jnp.float32),
        # b2 is a no-op under the batch-axis softmax and is not used.
    }


if __name__ == "__main__":
    B, S, D, VOCAB = 8, 8, 128, 32
    key = jax.random.PRNGKey(0)
    k_par, k_tok, k_msk = jax.random.split(key, 3)

    params = init_params(k_par, dim=D, vocab=VOCAB)

    input_tokens = jax.random.randint(k_tok, (B, S), 0, VOCAB, dtype=jnp.int32)
    input_types = jnp.concatenate(
        [jnp.zeros((B, S // 2), jnp.int32), jnp.ones((B, S // 2), jnp.int32)], axis=1)
    input_masks = (jax.random.uniform(k_msk, (B, S)) > 0.2).astype(jnp.int32)
    input_masks = input_masks.at[:, 0].set(1)  # ensure at least one valid token

    probs = jax.jit(jump_model_forward)(input_tokens, input_types, input_masks, params)
    probs = jax.block_until_ready(probs)

    assert probs.shape == (B,)
    assert jnp.isfinite(probs).all()
    assert abs(float(probs.sum()) - 1.0) < 1e-5  # softmax over batch axis sums to 1

    print("KERNEL_OK")
</pallas_src>

<mosaic_0001>
module attributes {stable_mosaic.version = 11 : i64} {
  func.func @jump_head_kernel(%arg0: i32, %arg1: memref<8x128xbf16, #tpu.memory_space<vmem>>, %arg2: memref<128x128xbf16, #tpu.memory_space<vmem>>, %arg3: memref<1x128xf32, #tpu.memory_space<vmem>>, %arg4: memref<128x128xbf16, #tpu.memory_space<vmem>>, %arg5: memref<1x128xf32, #tpu.memory_space<vmem>>, %arg6: memref<1x128xbf16, #tpu.memory_space<vmem>>, %arg7: memref<1x8xf32, #tpu.memory_space<vmem>>) attributes {dimension_semantics = [#tpu.dimension_semantics<arbitrary>], iteration_bounds = array<i64: 1>, scalar_prefetch = 0 : i64, scratch_operands = 0 : i64, tpu.core_type = #tpu.core_type<tc>, window_params = [{pipeline_mode = #tpu.pipeline_mode<synchronous>, transform_indices = @transform_0, window_bounds = array<i64: 8, 128>}, {pipeline_mode = #tpu.pipeline_mode<synchronous>, transform_indices = @transform_1, window_bounds = array<i64: 128, 128>}, {pipeline_mode = #tpu.pipeline_mode<synchronous>, transform_indices = @transform_2, window_bounds = array<i64: 1, 128>}, {pipeline_mode = #tpu.pipeline_mode<synchronous>, transform_indices = @transform_3, window_bounds = array<i64: 128, 128>}, {pipeline_mode = #tpu.pipeline_mode<synchronous>, transform_indices = @transform_4, window_bounds = array<i64: 1, 128>}, {pipeline_mode = #tpu.pipeline_mode<synchronous>, transform_indices = @transform_5, window_bounds = array<i64: 1, 128>}, {pipeline_mode = #tpu.pipeline_mode<synchronous>, transform_indices = @transform_6, window_bounds = array<i64: 1, 8>}]} {
    %c0 = arith.constant 0 : index
    %c0_0 = arith.constant 0 : index
    %0 = vector.load %arg1[%c0, %c0_0] : memref<8x128xbf16, #tpu.memory_space<vmem>>, vector<8x128xbf16>
    %c0_1 = arith.constant 0 : index
    %c0_2 = arith.constant 0 : index
    %1 = vector.load %arg2[%c0_1, %c0_2] : memref<128x128xbf16, #tpu.memory_space<vmem>>, vector<128x128xbf16>
    %cst = arith.constant dense<0.000000e+00> : vector<8x128xf32>
    %2 = tpu.matmul %0, %1, %cst {dimension_numbers = #tpu.dot_dimension_numbers<[1], [0], [0], [1], [0, 0, 1, 1], [], []>} : vector<8x128xbf16>, vector<128x128xbf16>, vector<8x128xf32> -> vector<8x128xf32>
    %c0_3 = arith.constant 0 : index
    %c0_4 = arith.constant 0 : index
    %3 = vector.load %arg3[%c0_3, %c0_4] : memref<1x128xf32, #tpu.memory_space<vmem>>, vector<1x128xf32>
    %4 = vector.broadcast %3 : vector<1x128xf32> to vector<8x128xf32>
    %5 = arith.addf %2, %4 : vector<8x128xf32>
    %6 = math.tanh %5 : vector<8x128xf32>
    %7 = arith.truncf %6 : vector<8x128xf32> to vector<8x128xbf16>
    %c0_5 = arith.constant 0 : index
    %c0_6 = arith.constant 0 : index
    %8 = vector.load %arg4[%c0_5, %c0_6] : memref<128x128xbf16, #tpu.memory_space<vmem>>, vector<128x128xbf16>
    %cst_7 = arith.constant dense<0.000000e+00> : vector<8x128xf32>
    %9 = tpu.matmul %7, %8, %cst_7 {dimension_numbers = #tpu.dot_dimension_numbers<[1], [0], [0], [1], [0, 0, 1, 1], [], []>} : vector<8x128xbf16>, vector<128x128xbf16>, vector<8x128xf32> -> vector<8x128xf32>
    %c0_8 = arith.constant 0 : index
    %c0_9 = arith.constant 0 : index
    %10 = vector.load %arg5[%c0_8, %c0_9] : memref<1x128xf32, #tpu.memory_space<vmem>>, vector<1x128xf32>
    %11 = vector.broadcast %10 : vector<1x128xf32> to vector<8x128xf32>
    %12 = arith.addf %9, %11 : vector<8x128xf32>
    %cst_10 = arith.constant 0.000000e+00 : f32
    %13 = vector.broadcast %cst_10 : f32 to vector<8x128xf32>
    %14 = arith.maximumf %12, %13 : vector<8x128xf32>
    %c0_11 = arith.constant 0 : index
    %c0_12 = arith.constant 0 : index
    %15 = vector.load %arg6[%c0_11, %c0_12] : memref<1x128xbf16, #tpu.memory_space<vmem>>, vector<1x128xbf16>
    %16 = arith.truncf %14 : vector<8x128xf32> to vector<8x128xbf16>
    %cst_13 = arith.constant dense<0.000000e+00> : vector<1x8xf32>
    %17 = tpu.matmul %15, %16, %cst_13 {dimension_numbers = #tpu.dot_dimension_numbers<[1], [1], [0], [0], [0, 0, 1, 0], [], []>} : vector<1x128xbf16>, vector<8x128xbf16>, vector<1x8xf32> -> vector<1x8xf32>
    %cst_14 = arith.constant dense<0xFF800000> : vector<1xf32>
    %18 = vector.multi_reduction <maximumf>, %17, %cst_14 [1] : vector<1x8xf32> to vector<1xf32>
    %19 = vector.shape_cast %18 : vector<1xf32> to vector<1x1xf32>
    %20 = vector.broadcast %19 : vector<1x1xf32> to vector<1x8xf32>
    %21 = arith.subf %17, %20 : vector<1x8xf32>
    %22 = math.exp %21 : vector<1x8xf32>
    %cst_15 = arith.constant dense<0.000000e+00> : vector<1xf32>
    %23 = vector.multi_reduction <add>, %22, %cst_15 [1] : vector<1x8xf32> to vector<1xf32>
    %24 = vector.shape_cast %23 : vector<1xf32> to vector<1x1xf32>
    %25 = tpu.reciprocal %24 : vector<1x1xf32> -> vector<1x1xf32>
    %26 = vector.broadcast %25 : vector<1x1xf32> to vector<1x8xf32>
    %27 = arith.mulf %22, %26 : vector<1x8xf32>
    %c0_16 = arith.constant 0 : index
    %c0_17 = arith.constant 0 : index
    %28 = vector.load %arg7[%c0_16, %c0_17] : memref<1x8xf32, #tpu.memory_space<vmem>>, vector<1x8xf32>
    tpu.vector_store %arg7[%c0_16, %c0_17], %27 {strides = array<i32>} : memref<1x8xf32, #tpu.memory_space<vmem>>, vector<1x8xf32>,
    return
  }
  func.func @transform_0(%arg0: i32) -> (i32, i32) {
    %c0_i32 = arith.constant 0 : i32
    %c0_i32_0 = arith.constant 0 : i32
    %c0_i32_1 = arith.constant 0 : i32
    return %c0_i32, %c0_i32_0 : i32, i32
  }
  func.func @transform_1(%arg0: i32) -> (i32, i32) {
    %c0_i32 = arith.constant 0 : i32
    %c0_i32_0 = arith.constant 0 : i32
    %c0_i32_1 = arith.constant 0 : i32
    return %c0_i32, %c0_i32_0 : i32, i32
  }
  func.func @transform_2(%arg0: i32) -> (i32, i32) {
    %c0_i32 = arith.constant 0 : i32
    %c0_i32_0 = arith.constant 0 : i32
    %c0_i32_1 = arith.constant 0 : i32
    return %c0_i32, %c0_i32_0 : i32, i32
  }
  func.func @transform_3(%arg0: i32) -> (i32, i32) {
    %c0_i32 = arith.constant 0 : i32
    %c0_i32_0 = arith.constant 0 : i32
    %c0_i32_1 = arith.constant 0 : i32
    return %c0_i32, %c0_i32_0 : i32, i32
  }
  func.func @transform_4(%arg0: i32) -> (i32, i32) {
    %c0_i32 = arith.constant 0 : i32
    %c0_i32_0 = arith.constant 0 : i32
    %c0_i32_1 = arith.constant 0 : i32
    return %c0_i32, %c0_i32_0 : i32, i32
  }
  func.func @transform_5(%arg0: i32) -> (i32, i32) {
    %c0_i32 = arith.constant 0 : i32
    %c0_i32_0 = arith.constant 0 : i32
    %c0_i32_1 = arith.constant 0 : i32
    return %c0_i32, %c0_i32_0 : i32, i32
  }
  func.func @transform_6(%arg0: i32) -> (i32, i32) {
    %c0_i32 = arith.constant 0 : i32
    %c0_i32_0 = arith.constant 0 : i32
    %c0_i32_1 = arith.constant 0 : i32
    return %c0_i32, %c0_i32_0 : i32, i32
  }
}

</mosaic_0001>

<llo_original>
// kernel: jump_model_forward.1
$region0: #{jump_model_forward.1}
  #allocation0 [shape = 'u32[]', space=smem, size = 0x4, offset = 0x4, fixed_abs, tag = 'smem constant byte address 0x4 - core index']
  #allocation1 [shape = 'u32[144,128]{1,0:T(1,128)}', space=vmem, size = 0x12000, scoped, tag = 'internal scratch']
  %s0 = inlined_call_operand.vmem [shape: bf16[8,128], index: 0, kind: input, shape index: {}]
  %s1 = inlined_call_operand.vmem [shape: bf16[128,128], index: 1, kind: input, shape index: {}]
  %s2 = inlined_call_operand.vmem [shape: f32[1,128], index: 2, kind: input, shape index: {}]
  %s3 = inlined_call_operand.vmem [shape: bf16[128,128], index: 3, kind: input, shape index: {}]
  %s4 = inlined_call_operand.vmem [shape: f32[1,128], index: 4, kind: input, shape index: {}]
  %s5 = inlined_call_operand.vmem [shape: bf16[1,128], index: 5, kind: input, shape index: {}]
  %s6 = inlined_call_operand.hbm [shape: f32[1,8], index: 6, kind: output, shape index: {}]
  %s7 = sld [smem:[#allocation0]]
  $region34: #{jump_model_forward.1} parent=0
    _
  %s9 = ssub.s32 1, %s7
  %s10 = scalar_select 0, %s9, %s7
  $region1: #{jump_model_forward.1} parent=0
    #allocation2 [shape = 'u8[512]{0}', space=vmem, size = 0x400, scoped, tag = 'output window, operand 0, single buffered']
    #allocation3 [shape = 's32[1]{0}', space=sflag, size = 0x4, scoped, tag = 'scoped memory for jump_model_forward.1']
    %11 = vsyncpa [#allocation3], 0
    // Predicated region
    $region2: #{jump_model_forward.1} parent=1 // pred_check
      _
    $region3: #{jump_model_forward.1} parent=1 // pred_check_branch
      %13 = sbr.rel (0) target = $region5
    $region4: #{jump_model_forward.1} parent=1 // pred_region
      _
    $region5: #{jump_model_forward.1} parent=1 // pred_fallthru
      _
    // Predicated region
    $region6: #{jump_model_forward.1} parent=1 // pred_check
      _
    $region7: #{jump_model_forward.1} parent=1 // pred_check_branch
      %15 = sbr.rel (0) target = $region9
    $region8: #{jump_model_forward.1} parent=1 // pred_region
      _
    $region9: #{jump_model_forward.1} parent=1 // pred_fallthru
      _
    // Predicated region
    $region10: #{jump_model_forward.1} parent=1 // pred_check
      _
    $region11: #{jump_model_forward.1} parent=1 // pred_check_branch
      %17 = sbr.rel (0) target = $region13
    $region12: #{jump_model_forward.1} parent=1 // pred_region
      _
    $region13: #{jump_model_forward.1} parent=1 // pred_fallthru
      _
    // Predicated region
    $region14: #{jump_model_forward.1} parent=1 // pred_check
      _
    $region15: #{jump_model_forward.1} parent=1 // pred_check_branch
      %19 = sbr.rel (0) target = $region17
    $region16: #{jump_model_forward.1} parent=1 // pred_region
      _
    $region17: #{jump_model_forward.1} parent=1 // pred_fallthru
      _
    // Predicated region
    $region18: #{jump_model_forward.1} parent=1 // pred_check
      _
    $region19: #{jump_model_forward.1} parent=1 // pred_check_branch
      %21 = sbr.rel (0) target = $region21
    $region20: #{jump_model_forward.1} parent=1 // pred_region
      _
    $region21: #{jump_model_forward.1} parent=1 // pred_fallthru
      _
    // Predicated region
    $region22: #{jump_model_forward.1} parent=1 // pred_check
      _
    $region23: #{jump_model_forward.1} parent=1 // pred_check_branch
      %23 = sbr.rel (0) target = $region25
    $region24: #{jump_model_forward.1} parent=1 // pred_region
      _
    $region25: #{jump_model_forward.1} parent=1 // pred_fallthru
      _
    %v25 = vld [vmem:[%s0] sm:$0xf]
    %v26 = vld [vmem:[%s1] sm:$0xf]
    %v27 = vld [vmem:[%s1 + $0x4] sm:$0xf]
    %v28 = vld [vmem:[%s1 + $0x8] sm:$0xf]
    %v29 = vld [vmem:[%s1 + $0xc] sm:$0xf]
    %v30 = vld [vmem:[%s1 + $0x10] sm:$0xf]
    %v31 = vld [vmem:[%s1 + $0x14] sm:$0xf]
    %v32 = vld [vmem:[%s1 + $0x18] sm:$0xf]
    %v33 = vld [vmem:[%s1 + $0x1c] sm:$0xf]
    %v34 = vld [vmem:[%s1 + $0x20] sm:$0xf]
    %v35 = vld [vmem:[%s1 + $0x24] sm:$0xf]
    %v36 = vld [vmem:[%s1 + $0x28] sm:$0xf]
    %v37 = vld [vmem:[%s1 + $0x2c] sm:$0xf]
    %v38 = vld [vmem:[%s1 + $0x30] sm:$0xf]
    %v39 = vld [vmem:[%s1 + $0x34] sm:$0xf]
    %v40 = vld [vmem:[%s1 + $0x38] sm:$0xf]
    %v41 = vld [vmem:[%s1 + $0x3c] sm:$0xf]
    %v42 = vld [vmem:[%s2] sm:$0x1]
    %v44 = vlaneseq
    %v45 = vshrl.u32 %v44, 7
    %v46 = vsub.s32 0, %v45
    %v47 = vrot.slane %v42, %v46
    %v65 = vunpack.c.l.b16 %v26
    %v66 = vunpack.c.l.b16 %v27
    %v67 = vunpack.c.l.b16 %v28
    %v68 = vunpack.c.l.b16 %v29
    %v69 = vunpack.c.l.b16 %v30
    %v70 = vunpack.c.l.b16 %v31
    %v71 = vunpack.c.l.b16 %v32
    %v72 = vunpack.c.l.b16 %v33
    %v73 = vunpack.c.l.b16 %v34
    %v74 = vunpack.c.l.b16 %v35
    %v75 = vunpack.c.l.b16 %v36
    %v76 = vunpack.c.l.b16 %v37
    %v77 = vunpack.c.l.b16 %v38
    %v78 = vunpack.c.l.b16 %v39
    %v79 = vunpack.c.l.b16 %v40
    %v80 = vunpack.c.l.b16 %v41
    %v81 = vpack.c.b16 %v66, %v65
    %v82 = vpack.c.b16 %v68, %v67
    %v83 = vpack.c.b16 %v70, %v69
    %v84 = vpack.c.b16 %v72, %v71
    %v85 = vpack.c.b16 %v74, %v73
    %v86 = vpack.c.b16 %v76, %v75
    %v87 = vpack.c.b16 %v78, %v77
    %v88 = vpack.c.b16 %v80, %v79
    %97 = vmatprep.subr.bf16.mxu0 0
    %98 = vmatpush1.bf16.msra.mxu0 %v81
    %99 = vmatprep.subr.bf16.mxu0 0
    %100 = vmatpush1.bf16.msra.mxu0 %v82
    %101 = vmatprep.subr.bf16.mxu0 0
    %102 = vmatpush1.bf16.msra.mxu0 %v83
    %103 = vmatprep.subr.bf16.mxu0 0
    %104 = vmatpush1.bf16.msra.mxu0 %v84
    %105 = vmatprep.subr.bf16.mxu0 0
    %106 = vmatpush1.bf16.msra.mxu0 %v85
    %107 = vmatprep.subr.bf16.mxu0 0
    %108 = vmatpush1.bf16.msra.mxu0 %v86
    %109 = vmatprep.subr.bf16.mxu0 0
    %110 = vmatpush1.bf16.msra.mxu0 %v87
    %111 = vmatprep.subr.bf16.mxu0 0
    %112 = vmatpush1.bf16.msra.mxu0 %v88
    %113 = vmatprep.subr.bf16.mxu0 0
    %114 = vmatpush1.bf16.msra.mxu0 0
    %115 = vmatprep.subr.bf16.mxu0 0
    %116 = vmatpush1.bf16.msra.mxu0 0
    %117 = vmatprep.subr.bf16.mxu0 0
    %118 = vmatpush1.bf16.msra.mxu0 0
    %119 = vmatprep.subr.bf16.mxu0 0
    %120 = vmatpush1.bf16.msra.mxu0 0
    %121 = vmatprep.subr.bf16.mxu0 0
    %122 = vmatpush1.bf16.msra.mxu0 0
    %123 = vmatprep.subr.bf16.mxu0 0
    %124 = vmatpush1.bf16.msra.mxu0 0
    %125 = vmatprep.subr.bf16.mxu0 0
    %126 = vmatpush1.bf16.msra.mxu0 0
    %127 = vmatprep.subr.bf16.mxu0 0
    %128 = vmatpush1.bf16.msra.mxu0 0
    %129 = vmatprep.mubr.bf16.mxu0 0
    %130 = vmatmul.mubr.bf16.gmra.mrb[0].mxu0 %v25
    %v131 = vpop.f32.mrb[0].mxu0
    %v132 = vadd.f32 %v47, %v131
    %v133 = vpop.f32.mrb[0].mxu0
    %v134 = vpop.f32.mrb[0].mxu0
    %v135 = vpop.f32.mrb[0].mxu0
    %136 = vdwg.mxu0
    %v137 = vtanh.pop %v132
    %v138 = vpack.c.bf16 %v137, %v137
    %v139 = vld [vmem:[%s3] sm:$0xf]
    %v140 = vld [vmem:[%s3 + $0x4] sm:$0xf]
    %v141 = vld [vmem:[%s3 + $0x8] sm:$0xf]
    %v142 = vld [vmem:[%s3 + $0xc] sm:$0xf]
    %v143 = vld [vmem:[%s3 + $0x10] sm:$0xf]
    %v144 = vld [vmem:[%s3 + $0x14] sm:$0xf]
    %v145 = vld [vmem:[%s3 + $0x18] sm:$0xf]
    %v146 = vld [vmem:[%s3 + $0x1c] sm:$0xf]
    %v147 = vld [vmem:[%s3 + $0x20] sm:$0xf]
    %v148 = vld [vmem:[%s3 + $0x24] sm:$0xf]
    %v149 = vld [vmem:[%s3 + $0x28] sm:$0xf]
    %v150 = vld [vmem:[%s3 + $0x2c] sm:$0xf]
    %v151 = vld [vmem:[%s3 + $0x30] sm:$0xf]
    %v152 = vld [vmem:[%s3 + $0x34] sm:$0xf]
    %v153 = vld [vmem:[%s3 + $0x38] sm:$0xf]
    %v154 = vld [vmem:[%s3 + $0x3c] sm:$0xf]
    %v155 = vld [vmem:[%s4] sm:$0x1]
    %v157 = vlaneseq
    %v158 = vshrl.u32 %v157, 7
    %v159 = vsub.s32 0, %v158
    %v160 = vrot.slane %v155, %v159
    %v178 = vunpack.c.l.b16 %v139
    %v179 = vunpack.c.l.b16 %v140
    %v180 = vunpack.c.l.b16 %v141
    %v181 = vunpack.c.l.b16 %v142
    %v182 = vunpack.c.l.b16 %v143
    %v183 = vunpack.c.l.b16 %v144
    %v184 = vunpack.c.l.b16 %v145
    %v185 = vunpack.c.l.b16 %v146
    %v186 = vunpack.c.l.b16 %v147
    %v187 = vunpack.c.l.b16 %v148
    %v188 = vunpack.c.l.b16 %v149
    %v189 = vunpack.c.l.b16 %v150
    %v190 = vunpack.c.l.b16 %v151
    %v191 = vunpack.c.l.b16 %v152
    %v192 = vunpack.c.l.b16 %v153
    %v193 = vunpack.c.l.b16 %v154
    %v194 = vpack.c.b16 %v179, %v178
    %v195 = vpack.c.b16 %v181, %v180
    %v196 = vpack.c.b16 %v183, %v182
    %v197 = vpack.c.b16 %v185, %v184
    %v198 = vpack.c.b16 %v187, %v186
    %v199 = vpack.c.b16 %v189, %v188
    %v200 = vpack.c.b16 %v191, %v190
    %v201 = vpack.c.b16 %v193, %v192
    %210 = vmatprep.subr.bf16.mxu0 0
    %211 = vmatpush1.bf16.msra.mxu0 %v194
    %212 = vmatprep.subr.bf16.mxu0 0
    %213 = vmatpush1.bf16.msra.mxu0 %v195
    %214 = vmatprep.subr.bf16.mxu0 0
    %215 = vmatpush1.bf16.msra.mxu0 %v196
    %216 = vmatprep.subr.bf16.mxu0 0
    %217 = vmatpush1.bf16.msra.mxu0 %v197
    %218 = vmatprep.subr.bf16.mxu0 0
    %219 = vmatpush1.bf16.msra.mxu0 %v198
    %220 = vmatprep.subr.bf16.mxu0 0
    %221 = vmatpush1.bf16.msra.mxu0 %v199
    %222 = vmatprep.subr.bf16.mxu0 0
    %223 = vmatpush1.bf16.msra.mxu0 %v200
    %224 = vmatprep.subr.bf16.mxu0 0
    %225 = vmatpush1.bf16.msra.mxu0 %v201
    %226 = vmatprep.subr.bf16.mxu0 0
    %227 = vmatpush1.bf16.msra.mxu0 0
    %228 = vmatprep.subr.bf16.mxu0 0
    %229 = vmatpush1.bf16.msra.mxu0 0
    %230 = vmatprep.subr.bf16.mxu0 0
    %231 = vmatpush1.bf16.msra.mxu0 0
    %232 = vmatprep.subr.bf16.mxu0 0
    %233 = vmatpush1.bf16.msra.mxu0 0
    %234 = vmatprep.subr.bf16.mxu0 0
    %235 = vmatpush1.bf16.msra.mxu0 0
    %236 = vmatprep.subr.bf16.mxu0 0
    %237 = vmatpush1.bf16.msra.mxu0 0
    %238 = vmatprep.subr.bf16.mxu0 0
    %239 = vmatpush1.bf16.msra.mxu0 0
    %240 = vmatprep.subr.bf16.mxu0 0
    %241 = vmatpush1.bf16.msra.mxu0 0
    %242 = vmatprep.mubr.bf16.mxu0 0
    %243 = vmatmul.mubr.bf16.gmra.mrb[0].mxu0 %v138
    %v244 = vpop.f32.mrb[0].mxu0
    %v245 = vadd.f32 %v160, %v244
    %v246 = vpop.f32.mrb[0].mxu0
    %v247 = vpop.f32.mrb[0].mxu0
    %v248 = vpop.f32.mrb[0].mxu0
    %249 = vdwg.mxu0
    %v250 = vmax.f32 %v245, 0.0
    %v251 = vld [vmem:[%s5] sm:$0x1]
    %v252 = vpack.c.bf16 %v250, %v250
    %253 = vmatprep.subr.bf16.mxu0 0
    %254 = vmatpush1.bf16.xpose.msra.mxu0 %v252
    %255 = vmatprep.subr.bf16.mxu0 0
    %256 = vmatpush1.bf16.xpose.msra.mxu0 0
    %257 = vmatprep.subr.bf16.mxu0 0
    %258 = vmatpush1.bf16.xpose.msra.mxu0 0
    %259 = vmatprep.subr.bf16.mxu0 0
    %260 = vmatpush1.bf16.xpose.msra.mxu0 0
    %261 = vmatprep.subr.bf16.mxu0 0
    %262 = vmatpush1.bf16.xpose.msra.mxu0 0
    %263 = vmatprep.subr.bf16.mxu0 0
    %264 = vmatpush1.bf16.xpose.msra.mxu0 0
    %265 = vmatprep.subr.bf16.mxu0 0
    %266 = vmatpush1.bf16.xpose.msra.mxu0 0
    %267 = vmatprep.subr.bf16.mxu0 0
    %268 = vmatpush1.bf16.xpose.msra.mxu0 0
    %269 = vmatprep.subr.bf16.mxu0 0
    %270 = vmatpush1.bf16.xpose.msra.mxu0 0
    %271 = vmatprep.subr.bf16.mxu0 0
    %272 = vmatpush1.bf16.xpose.msra.mxu0 0
    %273 = vmatprep.subr.bf16.mxu0 0
    %274 = vmatpush1.bf16.xpose.msra.mxu0 0
    %275 = vmatprep.subr.bf16.mxu0 0
    %276 = vmatpush1.bf16.xpose.msra.mxu0 0
    %277 = vmatprep.subr.bf16.mxu0 0
    %278 = vmatpush1.bf16.xpose.msra.mxu0 0
    %279 = vmatprep.subr.bf16.mxu0 0
    %280 = vmatpush1.bf16.xpose.msra.mxu0 0
    %281 = vmatprep.subr.bf16.mxu0 0
    %282 = vmatpush1.bf16.xpose.msra.mxu0 0
    %283 = vmatprep.subr.bf16.mxu0 0
    %284 = vmatpush1.bf16.xpose.msra.mxu0 0
    %285 = vmatprep.mubr.bf16.mxu0 0
    %286 = vmatmul.mubr.bf16.gmra.mrb[0].mxu0 %v251
    %v287 = vpop.f32.mrb[0].mxu0
    %v288 = vadd.f32 0.0, %v287
    %v289 = vpop.f32.mrb[0].mxu0
    %v290 = vpop.f32.mrb[0].mxu0
    %v291 = vpop.f32.mrb[0].mxu0
    %292 = vdwg.mxu0
    %vm293 = vcmask 57344
    %v294 = vsel %vm293, %v288, -inf
    %295 = vmax.xlane.f32.xlu0 %v294
    %v296 = vpop.xlane.xlu0 %295
    %v297 = vsub.f32 %v288, %v296
    %v298 = vmul.f32 %v297, 1.442695
    %v299 = vpow.pop %v298
    %v300 = vsel %vm293, %v299, 0.0
    %301 = vadd.xlane.f32.xlu0 %v300
    %v302 = vpop.xlane.xlu0 %301
    %v303 = vrcp.pop %v302
    %v304 = vmul.f32 %v299, %v303
    %305 = vst.msk [vmem:[#allocation2] sm:$0x1] %vm293, %v304
    // Predicated region
    $region26: #{jump_model_forward.1} parent=1 // pred_check
      _
    $region27: #{jump_model_forward.1} parent=1 // pred_check_branch
      %307 = sbr.rel (0) target = $region29
    $region28: #{jump_model_forward.1} parent=1 // pred_region
      %s309 = ssub.s32 16, 16
      %310 = vsyncadd [#allocation3], %s309
      %s312 = sshll.u32 [#allocation2], 4
      %s313 = int_to_ptr.vmem [resolvable:$true] %s312
      %315 = dma.vmem_to_hbm [thread:$0]  %s313, 16, %s6, [#allocation3]
    $region29: #{jump_model_forward.1} parent=1 // pred_fallthru
      _
    // Predicated region
    $region30: #{jump_model_forward.1} parent=1 // pred_check
      _
    $region31: #{jump_model_forward.1} parent=1 // pred_check_branch
      %317 = sbr.rel (0) target = $region33
    $region32: #{jump_model_forward.1} parent=1 // pred_region
      %318 = dma.done [#allocation3], 16
    $region33: #{jump_model_forward.1} parent=1 // pred_fallthru
      _
    %319 = vsyncpa [#allocation3], 1

</llo_original>
